<compile_context>
chip_gen: v7x
topology: tpu7x:2x2x1
jax: 0.10.0
libtpu: 0.0.40
codegen_flags: <defaults>
</compile_context>

<pallas_src>
import functools

import jax
import jax.numpy as jnp
from jax.experimental import pallas as pl
from jax.experimental.pallas import tpu as pltpu

_LANE = 128
_MIB = 1024 * 1024

# Per-buffer weight-tile budget (double-buffered by the pipeline).
_DEFAULT_W_TILE_BYTES = 8 * _MIB
# Never restrict below the v6e/v7x scoped default; stay under v7x's 64 MiB
# physical VMEM (v5e physical is 128 MiB so 32-60 MiB is always legal there).
_VMEM_FLOOR_BYTES = 32 * _MIB
_VMEM_CEIL_BYTES = 60 * _MIB
_VMEM_MARGIN_BYTES = 4 * _MIB


# ----------------------------- kernels ------------------------------------ #

def _proj_kernel_rows(x_ref, w_ref, b_ref, o_ref):
    """Primary path: one contiguous (tn, K) weight row slab per grid step.

    (1, K) . (tn, K)^T -> (1, tn), f32 MXU accumulation, bias add, cast.
    """
    acc = jax.lax.dot_general(
        x_ref[...], w_ref[...],
        dimension_numbers=(((1,), (1,)), ((), ())),
        preferred_element_type=jnp.float32,
    )
    o_ref[...] = (acc + b_ref[...].astype(jnp.float32)).astype(o_ref.dtype)


def _proj_kernel_ktiled(x_ref, w_ref, b_ref, o_ref, acc_ref, *, tk, tail_valid):
    """Fallback path (huge K): grid = (N//tn, K//tk), reduction axis (k) last."""
    k = pl.program_id(1)
    last = pl.num_programs(1) - 1

    @pl.when(k == 0)
    def _():
        # Seed the accumulator with the bias -> no epilogue add.
        acc_ref[...] = b_ref[...].astype(jnp.float32)

    w_tile = w_ref[...]
    if tail_valid != tk:
        # K is not a multiple of tk: zero the padded tail columns on the last
        # step.  x is zero-padded host-side, so the tail contributes exactly 0.
        valid = jnp.where(k == last, tail_valid, tk)
        lane = jax.lax.broadcasted_iota(jnp.int32, w_tile.shape, 1)
        w_tile = jnp.where(lane < valid, w_tile, jnp.zeros_like(w_tile))

    # x is fully resident in VMEM as (nk, tk); grab this step's (1, tk) row.
    x_tile = x_ref[pl.ds(k, 1), :]
    acc_ref[...] += jax.lax.dot_general(
        x_tile, w_tile,
        dimension_numbers=(((1,), (1,)), ((), ())),
        preferred_element_type=jnp.float32,
    )

    @pl.when(k == last)
    def _():
        o_ref[...] = acc_ref[...].astype(o_ref.dtype)


# --------------------------- tile selection -------------------------------- #

def _pick_tn_rows(N, K, itemsize, budget_bytes):
    """Output-axis tile for the contiguous full-K row path.

    Returns None when even the smallest lane-dense row block (128 rows x K)
    exceeds the budget -> use the K-tiled fallback.
    """
    row_bytes = max(K * itemsize, 1)
    if N <= _LANE:
        # Output/bias lane dim must be a multiple of 128 or the full dim N.
        return N if N * row_bytes <= budget_bytes else None
    if _LANE * row_bytes > budget_bytes:
        return None
    # Budget-bounded, 128-aligned tile.
    tn = min(N, (budget_bytes // row_bytes) // _LANE * _LANE)
    if N >= 2 * _LANE:
        # Guarantee >= 2 grid steps: pipeline overlap + v7x 2-TensorCore split.
        tn = min(tn, max(_LANE, (((N + 1) // 2) // _LANE) * _LANE))
    # Prefer an exact divisor of N (even work granules, no masked tail block).
    t = tn
    while t >= _LANE:
        if N % t == 0:
            return t
        t -= _LANE
    return tn  # no 128-multiple divisor of N: last block partial (masked store)


def _pick_k_tiles(N, K, itemsize, budget_bytes):
    """Fallback tiles for huge K: minimal lane-dense tn, budget-bounded tk."""
    tn = N if N <= _LANE else _LANE
    tk = max((budget_bytes // max(tn * itemsize, 1)) // _LANE * _LANE, _LANE)
    tk = min(tk, pl.cdiv(K, _LANE) * _LANE)
    t = tk
    while t >= _LANE:
        if K % t == 0:
            return tn, t               # exact divisor of K: no masked tail
        t -= _LANE
    return tn, tk                      # masked / zero-padded tail tile


def _vmem_limit(need_bytes):
    return int(min(max(need_bytes, _VMEM_FLOOR_BYTES), _VMEM_CEIL_BYTES))


# ------------------------------ wrapper ------------------------------------ #

def projection_layer_h(x, weight, bias, *, w_tile_bytes=_DEFAULT_W_TILE_BYTES):
    """Equivalent of ProjectionLayerH.forward.

    x:      any shape, prod(shape) == input_size (K)
    weight: (output_size, input_size)  -- native PyTorch nn.Linear layout (N, K)
    bias:   (output_size,)
    returns (1, output_size)
    """
    x_flat = x.reshape(1, -1)                 # torch .view(1, -1), row-major
    K = x_flat.shape[1]
    N, K_w = weight.shape
    assert K_w == K, "input_size mismatch"

    b2 = bias.reshape(1, N)
    out_dtype = x.dtype
    w_item = weight.dtype.itemsize
    x_item = x_flat.dtype.itemsize
    o_item = jnp.dtype(out_dtype).itemsize

    cost = pl.CostEstimate(
        flops=2 * N * K,
        transcendentals=0,
        bytes_accessed=N * K * w_item + K * x_item
        + N * bias.dtype.itemsize + N * o_item,
    )

    tn = _pick_tn_rows(N, K, w_item, w_tile_bytes)

    if tn is not None:
        # ---- Primary path: contiguous (tn, full-K) weight row slabs. -------
        nn = pl.cdiv(N, tn)
        vmem_need = (2 * (tn * K * w_item + K * x_item)
                     + 4 * tn * (bias.dtype.itemsize + o_item)
                     + _VMEM_MARGIN_BYTES)
        return pl.pallas_call(
            _proj_kernel_rows,
            out_shape=jax.ShapeDtypeStruct((1, N), out_dtype),
            grid_spec=pltpu.PrefetchScalarGridSpec(
                num_scalar_prefetch=0,
                grid=(nn,),
                in_specs=[
                    pl.BlockSpec((1, K), lambda j: (0, 0)),   # x (grid-invariant)
                    pl.BlockSpec((tn, K), lambda j: (j, 0)),  # W rows: contiguous HBM
                    pl.BlockSpec((1, tn), lambda j: (0, j)),  # bias
                ],
                out_specs=pl.BlockSpec((1, tn), lambda j: (0, j)),
            ),
            compiler_params=pltpu.CompilerParams(
                dimension_semantics=("parallel",),            # N shards across TCs
                vmem_limit_bytes=_vmem_limit(vmem_need),
            ),
            cost_estimate=cost,
        )(x_flat, weight, b2)

    # ---- Fallback path: K so large that 128 full rows bust the budget. -----
    tn, tk = _pick_k_tiles(N, K, w_item, w_tile_bytes)
    nn = pl.cdiv(N, tn)
    nk = pl.cdiv(K, tk)
    k_pad = nk * tk
    tail_valid = K - (nk - 1) * tk
    if k_pad != K:
        x_flat = jnp.pad(x_flat, ((0, 0), (0, k_pad - K)))    # tiny, zero tail
    x_rows = x_flat.reshape(nk, tk)          # fully resident in VMEM

    vmem_need = (2 * (tn * tk * w_item + k_pad * x_item)
                 + 4 * tn * (bias.dtype.itemsize + o_item)
                 + 4 * tn + _VMEM_MARGIN_BYTES)

    kernel = functools.partial(_proj_kernel_ktiled, tk=tk, tail_valid=tail_valid)
    return pl.pallas_call(
        kernel,
        out_shape=jax.ShapeDtypeStruct((1, N), out_dtype),
        grid_spec=pltpu.PrefetchScalarGridSpec(
            num_scalar_prefetch=0,
            grid=(nn, nk),                                    # reduction axis last
            in_specs=[
                pl.BlockSpec((nk, tk), lambda j, k: (0, 0)),  # x, fully resident
                pl.BlockSpec((tn, tk), lambda j, k: (j, k)),  # W, native (N, K)
                pl.BlockSpec((1, tn), lambda j, k: (0, j)),   # bias
            ],
            out_specs=pl.BlockSpec((1, tn), lambda j, k: (0, j)),
            scratch_shapes=[pltpu.VMEM((1, tn), jnp.float32)],
        ),
        compiler_params=pltpu.CompilerParams(
            dimension_semantics=("parallel", "arbitrary"),
            vmem_limit_bytes=_vmem_limit(vmem_need),
        ),
        cost_estimate=cost,
    )(x_rows, weight, b2)


# ------------------------------- test -------------------------------------- #

if __name__ == "__main__":
    key = jax.random.PRNGKey(0)

    def make_case(k, shape, output_size, dtype=jnp.float32):
        kx, kw, kb = jax.random.split(k, 3)
        x = jax.random.normal(kx, shape, dtype=dtype)
        input_size = x.size
        bound = 1.0 / (input_size ** 0.5)
        weight = jax.random.uniform(kw, (output_size, input_size), dtype=dtype,
                                    minval=-bound, maxval=bound)
        bias = jax.random.uniform(kb, (output_size,), dtype=dtype,
                                  minval=-bound, maxval=bound)
        return x, weight, bias

    k1, k2, k3 = jax.random.split(key, 3)

    # Case 1: the module's nominal small shape: x (2,4,16,16) -> K=2048, N=32.
    # Whole weight fits one contiguous slab -> single-step primary path.
    x, w, b = make_case(k1, (2, 4, 16, 16), 32)
    ref = x.reshape(1, -1) @ w.T + b
    out = jax.block_until_ready(projection_layer_h(x, w, b))
    assert out.shape == (1, 32)
    assert jnp.allclose(out, ref, atol=1e-4, rtol=1e-4)

    # Case 2: force the multi-block row path (tiny budget -> tn=128, 3 N-steps
    # of contiguous full-K row slabs, "parallel" grid).
    x2, w2, b2 = make_case(k2, (1, 256), 384)
    ref2 = x2.reshape(1, -1) @ w2.T + b2
    out2 = jax.block_until_ready(
        projection_layer_h(x2, w2, b2, w_tile_bytes=256 * 1024))
    assert jnp.allclose(out2, ref2, atol=1e-4, rtol=1e-4)

    # Case 3: force the K-tiled fallback with a non-128-aligned K (masked /
    # zero-padded tail tile) and a non-128-aligned N (partial last out block).
    x3, w3, b3 = make_case(k3, (1, 1000), 160)
    ref3 = x3.reshape(1, -1) @ w3.T + b3
    out3 = jax.block_until_ready(
        projection_layer_h(x3, w3, b3, w_tile_bytes=96 * 1024))
    assert jnp.allclose(out3, ref3, atol=1e-4, rtol=1e-4)

    print("KERNEL_OK")
</pallas_src>

<mosaic_0001>
module attributes {stable_mosaic.version = 11 : i64} {
  func.func @_proj_kernel_rows(%arg0: i32, %arg1: memref<1x2048xf32, #tpu.memory_space<vmem>>, %arg2: memref<32x2048xf32, #tpu.memory_space<vmem>>, %arg3: memref<1x32xf32, #tpu.memory_space<vmem>>, %arg4: memref<1x32xf32, #tpu.memory_space<vmem>>) attributes {dimension_semantics = [#tpu.dimension_semantics<parallel>], iteration_bounds = array<i64: 1>, scalar_prefetch = 0 : i64, scratch_operands = 0 : i64, tpu.core_type = #tpu.core_type<tc>, window_params = [{pipeline_mode = #tpu.pipeline_mode<synchronous>, transform_indices = @transform_0, window_bounds = array<i64: 1, 2048>}, {transform_indices = @transform_1, window_bounds = array<i64: 32, 2048>}, {transform_indices = @transform_2, window_bounds = array<i64: 1, 32>}, {transform_indices = @transform_3, window_bounds = array<i64: 1, 32>}]} {
    %c0 = arith.constant 0 : index
    %c0_0 = arith.constant 0 : index
    %0 = vector.load %arg1[%c0, %c0_0] : memref<1x2048xf32, #tpu.memory_space<vmem>>, vector<1x2048xf32>
    %c0_1 = arith.constant 0 : index
    %c0_2 = arith.constant 0 : index
    %1 = vector.load %arg2[%c0_1, %c0_2] : memref<32x2048xf32, #tpu.memory_space<vmem>>, vector<32x2048xf32>
    %cst = arith.constant dense<0.000000e+00> : vector<1x32xf32>
    %2 = tpu.matmul %0, %1, %cst {dimension_numbers = #tpu.dot_dimension_numbers<[1], [1], [0], [0], [0, 0, 1, 0], [], []>} : vector<1x2048xf32>, vector<32x2048xf32>, vector<1x32xf32> -> vector<1x32xf32>
    %c0_3 = arith.constant 0 : index
    %c0_4 = arith.constant 0 : index
    %3 = vector.load %arg3[%c0_3, %c0_4] : memref<1x32xf32, #tpu.memory_space<vmem>>, vector<1x32xf32>
    %4 = arith.addf %2, %3 : vector<1x32xf32>
    %c0_5 = arith.constant 0 : index
    %c0_6 = arith.constant 0 : index
    %5 = vector.load %arg4[%c0_5, %c0_6] : memref<1x32xf32, #tpu.memory_space<vmem>>, vector<1x32xf32>
    tpu.vector_store %arg4[%c0_5, %c0_6], %4 {strides = array<i32>} : memref<1x32xf32, #tpu.memory_space<vmem>>, vector<1x32xf32>,
    return
  }
  func.func @transform_0(%arg0: i32) -> (i32, i32) {
    %c0_i32 = arith.constant 0 : i32
    %c0_i32_0 = arith.constant 0 : i32
    %c0_i32_1 = arith.constant 0 : i32
    return %c0_i32, %c0_i32_0 : i32, i32
  }
  func.func @transform_1(%arg0: i32) -> (i32, i32) {
    %c0_i32 = arith.constant 0 : i32
    %c0_i32_0 = arith.constant 0 : i32
    return %arg0, %c0_i32 : i32, i32
  }
  func.func @transform_2(%arg0: i32) -> (i32, i32) {
    %c0_i32 = arith.constant 0 : i32
    %c0_i32_0 = arith.constant 0 : i32
    return %c0_i32, %arg0 : i32, i32
  }
  func.func @transform_3(%arg0: i32) -> (i32, i32) {
    %c0_i32 = arith.constant 0 : i32
    %c0_i32_0 = arith.constant 0 : i32
    return %c0_i32, %arg0 : i32, i32
  }
}

</mosaic_0001>

<llo_original>
// kernel: tpu_custom_call.1
$region0: #{tpu_custom_call.1}
  #allocation0 [shape = 'u32[]', space=smem, size = 0x4, offset = 0x4, fixed_abs, tag = 'smem constant byte address 0x4 - core index']
  #allocation1 [shape = 'u32[144,128]{1,0:T(1,128)}', space=vmem, size = 0x12000, scoped, tag = 'internal scratch']
  %s0 = inlined_call_operand.hbm [shape: f32[1,2048], index: 0, kind: input, shape index: {}]
  %s1 = inlined_call_operand.hbm [shape: f32[32,2048], index: 1, kind: input, shape index: {}]
  %s2 = inlined_call_operand.vmem [shape: f32[1,32], index: 2, kind: input, shape index: {}]
  %s3 = inlined_call_operand.hbm [shape: f32[1,32], index: 3, kind: output, shape index: {}]
  %s4 = sld [smem:[#allocation0]]
  $region30: #{tpu_custom_call.1} parent=0
    _
  %s6 = ssub.s32 1, %s4
  %s7 = scalar_select 0, %s6, %s4
  $region1: #{tpu_custom_call.1} parent=0
    #allocation2 [shape = 'u8[8192]{0}', space=vmem, size = 0x2000, scoped, tag = 'input window, operand 0, single buffered']
    #allocation3 [shape = 's32[1]{0}', space=sflag, size = 0x4, scoped, tag = 'scoped memory for tpu_custom_call.1']
    #allocation4 [shape = 's32[1]{0}', space=sflag, size = 0x4, scoped, tag = 'scoped memory for tpu_custom_call.1']
    #allocation5 [shape = 'u8[262144]{0}', space=vmem, size = 0x40000, scoped, tag = 'input window, operand 1, single buffered']
    #allocation6 [shape = 's32[1]{0}', space=sflag, size = 0x4, scoped, tag = 'scoped memory for tpu_custom_call.1']
    #allocation7 [shape = 'u8[512]{0}', space=vmem, size = 0x400, scoped, tag = 'output window, operand 0, single buffered']
    %8 = vsyncpa [#allocation3], 0
    %9 = vsyncpa [#allocation6], 0
    %10 = vsyncpa [#allocation4], 0
    // Predicated region
    $region2: #{tpu_custom_call.1} parent=1 // pred_check
      _
    $region3: #{tpu_custom_call.1} parent=1 // pred_check_branch
      %12 = sbr.rel (0) target = $region5
    $region4: #{tpu_custom_call.1} parent=1 // pred_region
      %s14 = ssub.s32 256, 256
      %15 = vsyncadd [#allocation3], %s14
      %s17 = sshll.u32 [#allocation2], 4
      %s18 = int_to_ptr.vmem [resolvable:$true] %s17
      %20 = dma.hbm_to_vmem [thread:$0]  %s0, 256, %s18, [#allocation3]
    $region5: #{tpu_custom_call.1} parent=1 // pred_fallthru
      _
    // Predicated region
    $region6: #{tpu_custom_call.1} parent=1 // pred_check
      _
    $region7: #{tpu_custom_call.1} parent=1 // pred_check_branch
      %22 = sbr.rel (0) target = $region9
    $region8: #{tpu_custom_call.1} parent=1 // pred_region
      %s24 = ssub.s32 8192, 8192
      %25 = vsyncadd [#allocation6], %s24
      %s26 = sshll.u32 [#allocation5], 4
      %s27 = int_to_ptr.vmem [resolvable:$true] %s26
      %32 = dma.hbm_to_vmem [thread:$0]  %s1, 8192, %s27, [#allocation6], 2048, 2048, 128
    $region9: #{tpu_custom_call.1} parent=1 // pred_fallthru
      _
    // Predicated region
    $region10: #{tpu_custom_call.1} parent=1 // pred_check
      _
    $region11: #{tpu_custom_call.1} parent=1 // pred_check_branch
      %34 = sbr.rel (0) target = $region13
    $region12: #{tpu_custom_call.1} parent=1 // pred_region
      _
    $region13: #{tpu_custom_call.1} parent=1 // pred_fallthru
      _
    // Predicated region
    $region14: #{tpu_custom_call.1} parent=1 // pred_check
      _
    $region15: #{tpu_custom_call.1} parent=1 // pred_check_branch
      %36 = sbr.rel (0) target = $region17
    $region16: #{tpu_custom_call.1} parent=1 // pred_region
      %37 = dma.done [#allocation3], 256
    $region17: #{tpu_custom_call.1} parent=1 // pred_fallthru
      _
    // Predicated region
    $region18: #{tpu_custom_call.1} parent=1 // pred_check
      _
    $region19: #{tpu_custom_call.1} parent=1 // pred_check_branch
      %39 = sbr.rel (0) target = $region21
    $region20: #{tpu_custom_call.1} parent=1 // pred_region
      %40 = dma.done [#allocation6], 8192
    $region21: #{tpu_custom_call.1} parent=1 // pred_fallthru
      _
    %v41 = vld [vmem:[#allocation2] sm:$0xff]
    %v42 = vld [vmem:[#allocation2 + $0x8] sm:$0xff]
    %v43 = vld [vmem:[#allocation5] sm:$0xff]
    %v44 = vld [vmem:[#allocation5 + $0x8] sm:$0xff]
    %v45 = vld [vmem:[#allocation5 + $0x10] sm:$0xff]
    %v46 = vld [vmem:[#allocation5 + $0x18] sm:$0xff]
    %v47 = vld [vmem:[#allocation5 + $0x20] sm:$0xff]
    %v48 = vld [vmem:[#allocation5 + $0x28] sm:$0xff]
    %v49 = vld [vmem:[#allocation5 + $0x30] sm:$0xff]
    %v50 = vld [vmem:[#allocation5 + $0x38] sm:$0xff]
    %v51 = vld [vmem:[#allocation5 + $0x40] sm:$0xff]
    %v52 = vld [vmem:[#allocation5 + $0x48] sm:$0xff]
    %v53 = vld [vmem:[#allocation5 + $0x50] sm:$0xff]
    %v54 = vld [vmem:[#allocation5 + $0x58] sm:$0xff]
    %v55 = vld [vmem:[#allocation5 + $0x60] sm:$0xff]
    %v56 = vld [vmem:[#allocation5 + $0x68] sm:$0xff]
    %v57 = vld [vmem:[#allocation5 + $0x70] sm:$0xff]
    %v58 = vld [vmem:[#allocation5 + $0x78] sm:$0xff]
    %v59 = vld [vmem:[#allocation5 + $0x80] sm:$0xff]
    %v60 = vld [vmem:[#allocation5 + $0x88] sm:$0xff]
    %v61 = vld [vmem:[#allocation5 + $0x90] sm:$0xff]
    %v62 = vld [vmem:[#allocation5 + $0x98] sm:$0xff]
    %v63 = vld [vmem:[#allocation5 + $0xa0] sm:$0xff]
    %v64 = vld [vmem:[#allocation5 + $0xa8] sm:$0xff]
    %v65 = vld [vmem:[#allocation5 + $0xb0] sm:$0xff]
    %v66 = vld [vmem:[#allocation5 + $0xb8] sm:$0xff]
    %v67 = vld [vmem:[#allocation5 + $0xc0] sm:$0xff]
    %v68 = vld [vmem:[#allocation5 + $0xc8] sm:$0xff]
    %v69 = vld [vmem:[#allocation5 + $0xd0] sm:$0xff]
    %v70 = vld [vmem:[#allocation5 + $0xd8] sm:$0xff]
    %v71 = vld [vmem:[#allocation5 + $0xe0] sm:$0xff]
    %v72 = vld [vmem:[#allocation5 + $0xe8] sm:$0xff]
    %v73 = vld [vmem:[#allocation5 + $0xf0] sm:$0xff]
    %v74 = vld [vmem:[#allocation5 + $0xf8] sm:$0xff]
    %v75 = vld [vmem:[#allocation5 + $0x100] sm:$0xff]
    %v76 = vld [vmem:[#allocation5 + $0x108] sm:$0xff]
    %v77 = vld [vmem:[#allocation5 + $0x110] sm:$0xff]
    %v78 = vld [vmem:[#allocation5 + $0x118] sm:$0xff]
    %v79 = vld [vmem:[#allocation5 + $0x120] sm:$0xff]
    %v80 = vld [vmem:[#allocation5 + $0x128] sm:$0xff]
    %v81 = vld [vmem:[#allocation5 + $0x130] sm:$0xff]
    %v82 = vld [vmem:[#allocation5 + $0x138] sm:$0xff]
    %v83 = vld [vmem:[#allocation5 + $0x140] sm:$0xff]
    %v84 = vld [vmem:[#allocation5 + $0x148] sm:$0xff]
    %v85 = vld [vmem:[#allocation5 + $0x150] sm:$0xff]
    %v86 = vld [vmem:[#allocation5 + $0x158] sm:$0xff]
    %v87 = vld [vmem:[#allocation5 + $0x160] sm:$0xff]
    %v88 = vld [vmem:[#allocation5 + $0x168] sm:$0xff]
    %v89 = vld [vmem:[#allocation5 + $0x170] sm:$0xff]
    %v90 = vld [vmem:[#allocation5 + $0x178] sm:$0xff]
    %v91 = vld [vmem:[#allocation5 + $0x180] sm:$0xff]
    %v92 = vld [vmem:[#allocation5 + $0x188] sm:$0xff]
    %v93 = vld [vmem:[#allocation5 + $0x190] sm:$0xff]
    %v94 = vld [vmem:[#allocation5 + $0x198] sm:$0xff]
    %v95 = vld [vmem:[#allocation5 + $0x1a0] sm:$0xff]
    %v96 = vld [vmem:[#allocation5 + $0x1a8] sm:$0xff]
    %v97 = vld [vmem:[#allocation5 + $0x1b0] sm:$0xff]
    %v98 = vld [vmem:[#allocation5 + $0x1b8] sm:$0xff]
    %v99 = vld [vmem:[#allocation5 + $0x1c0] sm:$0xff]
    %v100 = vld [vmem:[#allocation5 + $0x1c8] sm:$0xff]
    %v101 = vld [vmem:[#allocation5 + $0x1d0] sm:$0xff]
    %v102 = vld [vmem:[#allocation5 + $0x1d8] sm:$0xff]
    %v103 = vld [vmem:[#allocation5 + $0x1e0] sm:$0xff]
    %v104 = vld [vmem:[#allocation5 + $0x1e8] sm:$0xff]
    %v105 = vld [vmem:[#allocation5 + $0x1f0] sm:$0xff]
    %v106 = vld [vmem:[#allocation5 + $0x1f8] sm:$0xff]
    %v107 = vld [vmem:[%s2] sm:$0x1]
    %v110 = vlaneseq
    %v111 = vshrl.u32 %v110, 7
    %v112 = vsub.s32 0, %v111
    %v113 = vrot.slane %v41, %v112
    %v114 = vlaneseq
    %v115 = vshrl.u32 %v114, 7
    %v116 = vsub.s32 1, %v115
    %v117 = vrot.slane %v41, %v116
    %v118 = vlaneseq
    %v119 = vshrl.u32 %v118, 7
    %v120 = vsub.s32 2, %v119
    %v121 = vrot.slane %v41, %v120
    %v122 = vlaneseq
    %v123 = vshrl.u32 %v122, 7
    %v124 = vsub.s32 3, %v123
    %v125 = vrot.slane %v41, %v124
    %v126 = vlaneseq
    %v127 = vshrl.u32 %v126, 7
    %v128 = vsub.s32 4, %v127
    %v129 = vrot.slane %v41, %v128
    %v130 = vlaneseq
    %v131 = vshrl.u32 %v130, 7
    %v132 = vsub.s32 5, %v131
    %v133 = vrot.slane %v41, %v132
    %v134 = vlaneseq
    %v135 = vshrl.u32 %v134, 7
    %v136 = vsub.s32 6, %v135
    %v137 = vrot.slane %v41, %v136
    %v138 = vlaneseq
    %v139 = vshrl.u32 %v138, 7
    %v140 = vsub.s32 7, %v139
    %v141 = vrot.slane %v41, %v140
    %v142 = vlaneseq
    %v143 = vshrl.u32 %v142, 7
    %v144 = vsub.s32 0, %v143
    %v145 = vrot.slane %v42, %v144
    %v146 = vlaneseq
    %v147 = vshrl.u32 %v146, 7
    %v148 = vsub.s32 1, %v147
    %v149 = vrot.slane %v42, %v148
    %v150 = vlaneseq
    %v151 = vshrl.u32 %v150, 7
    %v152 = vsub.s32 2, %v151
    %v153 = vrot.slane %v42, %v152
    %v154 = vlaneseq
    %v155 = vshrl.u32 %v154, 7
    %v156 = vsub.s32 3, %v155
    %v157 = vrot.slane %v42, %v156
    %v158 = vlaneseq
    %v159 = vshrl.u32 %v158, 7
    %v160 = vsub.s32 4, %v159
    %v161 = vrot.slane %v42, %v160
    %v162 = vlaneseq
    %v163 = vshrl.u32 %v162, 7
    %v164 = vsub.s32 5, %v163
    %v165 = vrot.slane %v42, %v164
    %v166 = vlaneseq
    %v167 = vshrl.u32 %v166, 7
    %v168 = vsub.s32 6, %v167
    %v169 = vrot.slane %v42, %v168
    %v170 = vlaneseq
    %v171 = vshrl.u32 %v170, 7
    %v172 = vsub.s32 7, %v171
    %v173 = vrot.slane %v42, %v172
    %190 = vmatprep.subr.mxu0 %v44
    %191 = vmatpush1.xpose.msra.mxu0 %v43
    %192 = vmatprep.subr.mxu0 %v60
    %193 = vmatpush1.xpose.msra.mxu0 %v59
    %194 = vmatprep.subr.mxu0 %v76
    %195 = vmatpush1.xpose.msra.mxu0 %v75
    %196 = vmatprep.subr.mxu0 %v92
    %197 = vmatpush1.xpose.msra.mxu0 %v91
    %198 = vmatprep.subr.mxu0 0.0
    %199 = vmatpush1.xpose.msra.mxu0 0.0
    %200 = vmatprep.subr.mxu0 0.0
    %201 = vmatpush1.xpose.msra.mxu0 0.0
    %202 = vmatprep.subr.mxu0 0.0
    %203 = vmatpush1.xpose.msra.mxu0 0.0
    %204 = vmatprep.subr.mxu0 0.0
    %205 = vmatpush1.xpose.msra.mxu0 0.0
    %206 = vmatprep.subr.mxu0 0.0
    %207 = vmatpush1.xpose.msra.mxu0 0.0
    %208 = vmatprep.subr.mxu0 0.0
    %209 = vmatpush1.xpose.msra.mxu0 0.0
    %210 = vmatprep.subr.mxu0 0.0
    %211 = vmatpush1.xpose.msra.mxu0 0.0
    %212 = vmatprep.subr.mxu0 0.0
    %213 = vmatpush1.xpose.msra.mxu0 0.0
    %214 = vmatprep.subr.mxu0 0.0
    %215 = vmatpush1.xpose.msra.mxu0 0.0
    %216 = vmatprep.subr.mxu0 0.0
    %217 = vmatpush1.xpose.msra.mxu0 0.0
    %218 = vmatprep.subr.mxu0 0.0
    %219 = vmatpush1.xpose.msra.mxu0 0.0
    %220 = vmatprep.subr.mxu0 0.0
    %221 = vmatpush1.xpose.msra.mxu0 0.0
    %222 = vmatprep.subr.mxu0 0.0
    %223 = vmatpush1.xpose.msra.mxu0 0.0
    %224 = vmatprep.subr.mxu0 0.0
    %225 = vmatpush1.xpose.msra.mxu0 0.0
    %226 = vmatprep.subr.mxu0 0.0
    %227 = vmatpush1.xpose.msra.mxu0 0.0
    %228 = vmatprep.subr.mxu0 0.0
    %229 = vmatpush1.xpose.msra.mxu0 0.0
    %230 = vmatprep.subr.mxu0 0.0
    %231 = vmatpush1.xpose.msra.mxu0 0.0
    %232 = vmatprep.subr.mxu0 0.0
    %233 = vmatpush1.xpose.msra.mxu0 0.0
    %234 = vmatprep.subr.mxu0 0.0
    %235 = vmatpush1.xpose.msra.mxu0 0.0
    %236 = vmatprep.subr.mxu0 0.0
    %237 = vmatpush1.xpose.msra.mxu0 0.0
    %238 = vmatprep.subr.mxu0 0.0
    %239 = vmatpush1.xpose.msra.mxu0 0.0
    %240 = vmatprep.subr.mxu0 0.0
    %241 = vmatpush1.xpose.msra.mxu0 0.0
    %242 = vmatprep.subr.mxu0 0.0
    %243 = vmatpush1.xpose.msra.mxu0 0.0
    %244 = vmatprep.subr.mxu0 0.0
    %245 = vmatpush1.xpose.msra.mxu0 0.0
    %246 = vmatprep.subr.mxu0 0.0
    %247 = vmatpush1.xpose.msra.mxu0 0.0
    %248 = vmatprep.subr.mxu0 0.0
    %249 = vmatpush1.xpose.msra.mxu0 0.0
    %250 = vmatprep.subr.mxu0 0.0
    %251 = vmatpush1.xpose.msra.mxu0 0.0
    %252 = vmatprep.subr.mxu0 0.0
    %253 = vmatpush1.xpose.msra.mxu0 0.0
    %254 = vmatprep.mubr.f32.mxu0 %v117
    %255 = vmatmul.mubr.f32.gmra.mrb[0].mxu0 %v113
    %v256 = vpop.f32.mrb[0].mxu0
    %v257 = vadd.f32 %v107, %v256
    %v258 = vpop.f32.mrb[0].mxu0
    %259 = vdwg.mxu0
    %260 = vmatprep.subr.mxu0 %v46
    %261 = vmatpush1.xpose.msra.mxu0 %v45
    %262 = vmatprep.subr.mxu0 %v62
    %263 = vmatpush1.xpose.msra.mxu0 %v61
    %264 = vmatprep.subr.mxu0 %v78
    %265 = vmatpush1.xpose.msra.mxu0 %v77
    %266 = vmatprep.subr.mxu0 %v94
    %267 = vmatpush1.xpose.msra.mxu0 %v93
    %268 = vmatprep.subr.mxu0 0.0
    %269 = vmatpush1.xpose.msra.mxu0 0.0
    %270 = vmatprep.subr.mxu0 0.0
    %271 = vmatpush1.xpose.msra.mxu0 0.0
    %272 = vmatprep.subr.mxu0 0.0
    %273 = vmatpush1.xpose.msra.mxu0 0.0
    %274 = vmatprep.subr.mxu0 0.0
    %275 = vmatpush1.xpose.msra.mxu0 0.0
    %276 = vmatprep.subr.mxu0 0.0
    %277 = vmatpush1.xpose.msra.mxu0 0.0
    %278 = vmatprep.subr.mxu0 0.0
    %279 = vmatpush1.xpose.msra.mxu0 0.0
    %280 = vmatprep.subr.mxu0 0.0
    %281 = vmatpush1.xpose.msra.mxu0 0.0
    %282 = vmatprep.subr.mxu0 0.0
    %283 = vmatpush1.xpose.msra.mxu0 0.0
    %284 = vmatprep.subr.mxu0 0.0
    %285 = vmatpush1.xpose.msra.mxu0 0.0
    %286 = vmatprep.subr.mxu0 0.0
    %287 = vmatpush1.xpose.msra.mxu0 0.0
    %288 = vmatprep.subr.mxu0 0.0
    %289 = vmatpush1.xpose.msra.mxu0 0.0
    %290 = vmatprep.subr.mxu0 0.0
    %291 = vmatpush1.xpose.msra.mxu0 0.0
    %292 = vmatprep.subr.mxu0 0.0
    %293 = vmatpush1.xpose.msra.mxu0 0.0
    %294 = vmatprep.subr.mxu0 0.0
    %295 = vmatpush1.xpose.msra.mxu0 0.0
    %296 = vmatprep.subr.mxu0 0.0
    %297 = vmatpush1.xpose.msra.mxu0 0.0
    %298 = vmatprep.subr.mxu0 0.0
    %299 = vmatpush1.xpose.msra.mxu0 0.0
    %300 = vmatprep.subr.mxu0 0.0
    %301 = vmatpush1.xpose.msra.mxu0 0.0
    %302 = vmatprep.subr.mxu0 0.0
    %303 = vmatpush1.xpose.msra.mxu0 0.0
    %304 = vmatprep.subr.mxu0 0.0
    %305 = vmatpush1.xpose.msra.mxu0 0.0
    %306 = vmatprep.subr.mxu0 0.0
    %307 = vmatpush1.xpose.msra.mxu0 0.0
    %308 = vmatprep.subr.mxu0 0.0
    %309 = vmatpush1.xpose.msra.mxu0 0.0
    %310 = vmatprep.subr.mxu0 0.0
    %311 = vmatpush1.xpose.msra.mxu0 0.0
    %312 = vmatprep.subr.mxu0 0.0
    %313 = vmatpush1.xpose.msra.mxu0 0.0
    %314 = vmatprep.subr.mxu0 0.0
    %315 = vmatpush1.xpose.msra.mxu0 0.0
    %316 = vmatprep.subr.mxu0 0.0
    %317 = vmatpush1.xpose.msra.mxu0 0.0
    %318 = vmatprep.subr.mxu0 0.0
    %319 = vmatpush1.xpose.msra.mxu0 0.0
    %320 = vmatprep.subr.mxu0 0.0
    %321 = vmatpush1.xpose.msra.mxu0 0.0
    %322 = vmatprep.subr.mxu0 0.0
    %323 = vmatpush1.xpose.msra.mxu0 0.0
    %324 = vmatprep.mubr.f32.mxu0 %v125
    %325 = vmatmul.mubr.f32.gmra.mrb[0].mxu0 %v121
    %v326 = vpop.f32.mrb[0].mxu0
    %v327 = vadd.f32 %v257, %v326
    %v328 = vpop.f32.mrb[0].mxu0
    %329 = vdwg.mxu0
    %330 = vmatprep.subr.mxu0 %v48
    %331 = vmatpush1.xpose.msra.mxu0 %v47
    %332 = vmatprep.subr.mxu0 %v64
    %333 = vmatpush1.xpose.msra.mxu0 %v63
    %334 = vmatprep.subr.mxu0 %v80
    %335 = vmatpush1.xpose.msra.mxu0 %v79
    %336 = vmatprep.subr.mxu0 %v96
    %337 = vmatpush1.xpose.msra.mxu0 %v95
    %338 = vmatprep.subr.mxu0 0.0
    %339 = vmatpush1.xpose.msra.mxu0 0.0
    %340 = vmatprep.subr.mxu0 0.0
    %341 = vmatpush1.xpose.msra.mxu0 0.0
    %342 = vmatprep.subr.mxu0 0.0
    %343 = vmatpush1.xpose.msra.mxu0 0.0
    %344 = vmatprep.subr.mxu0 0.0
    %345 = vmatpush1.xpose.msra.mxu0 0.0
    %346 = vmatprep.subr.mxu0 0.0
    %347 = vmatpush1.xpose.msra.mxu0 0.0
    %348 = vmatprep.subr.mxu0 0.0
    %349 = vmatpush1.xpose.msra.mxu0 0.0
    %350 = vmatprep.subr.mxu0 0.0
    %351 = vmatpush1.xpose.msra.mxu0 0.0
    %352 = vmatprep.subr.mxu0 0.0
    %353 = vmatpush1.xpose.msra.mxu0 0.0
    %354 = vmatprep.subr.mxu0 0.0
    %355 = vmatpush1.xpose.msra.mxu0 0.0
    %356 = vmatprep.subr.mxu0 0.0
    %357 = vmatpush1.xpose.msra.mxu0 0.0
    %358 = vmatprep.subr.mxu0 0.0
    %359 = vmatpush1.xpose.msra.mxu0 0.0
    %360 = vmatprep.subr.mxu0 0.0
    %361 = vmatpush1.xpose.msra.mxu0 0.0
    %362 = vmatprep.subr.mxu0 0.0
    %363 = vmatpush1.xpose.msra.mxu0 0.0
    %364 = vmatprep.subr.mxu0 0.0
    %365 = vmatpush1.xpose.msra.mxu0 0.0
    %366 = vmatprep.subr.mxu0 0.0
    %367 = vmatpush1.xpose.msra.mxu0 0.0
    %368 = vmatprep.subr.mxu0 0.0
    %369 = vmatpush1.xpose.msra.mxu0 0.0
    %370 = vmatprep.subr.mxu0 0.0
    %371 = vmatpush1.xpose.msra.mxu0 0.0
    %372 = vmatprep.subr.mxu0 0.0
    %373 = vmatpush1.xpose.msra.mxu0 0.0
    %374 = vmatprep.subr.mxu0 0.0
    %375 = vmatpush1.xpose.msra.mxu0 0.0
    %376 = vmatprep.subr.mxu0 0.0
    %377 = vmatpush1.xpose.msra.mxu0 0.0
    %378 = vmatprep.subr.mxu0 0.0
    %379 = vmatpush1.xpose.msra.mxu0 0.0
    %380 = vmatprep.subr.mxu0 0.0
    %381 = vmatpush1.xpose.msra.mxu0 0.0
    %382 = vmatprep.subr.mxu0 0.0
    %383 = vmatpush1.xpose.msra.mxu0 0.0
    %384 = vmatprep.subr.mxu0 0.0
    %385 = vmatpush1.xpose.msra.mxu0 0.0
    %386 = vmatprep.subr.mxu0 0.0
    %387 = vmatpush1.xpose.msra.mxu0 0.0
    %388 = vmatprep.subr.mxu0 0.0
    %389 = vmatpush1.xpose.msra.mxu0 0.0
    %390 = vmatprep.subr.mxu0 0.0
    %391 = vmatpush1.xpose.msra.mxu0 0.0
    %392 = vmatprep.subr.mxu0 0.0
    %393 = vmatpush1.xpose.msra.mxu0 0.0
    %394 = vmatprep.mubr.f32.mxu0 %v133
    %395 = vmatmul.mubr.f32.gmra.mrb[0].mxu0 %v129
    %v396 = vpop.f32.mrb[0].mxu0
    %v397 = vadd.f32 %v327, %v396
    %v398 = vpop.f32.mrb[0].mxu0
    %399 = vdwg.mxu0
    %400 = vmatprep.subr.mxu0 %v50
    %401 = vmatpush1.xpose.msra.mxu0 %v49
    %402 = vmatprep.subr.mxu0 %v66
    %403 = vmatpush1.xpose.msra.mxu0 %v65
    %404 = vmatprep.subr.mxu0 %v82
    %405 = vmatpush1.xpose.msra.mxu0 %v81
    %406 = vmatprep.subr.mxu0 %v98
    %407 = vmatpush1.xpose.msra.mxu0 %v97
    %408 = vmatprep.subr.mxu0 0.0
    %409 = vmatpush1.xpose.msra.mxu0 0.0
    %410 = vmatprep.subr.mxu0 0.0
    %411 = vmatpush1.xpose.msra.mxu0 0.0
    %412 = vmatprep.subr.mxu0 0.0
    %413 = vmatpush1.xpose.msra.mxu0 0.0
    %414 = vmatprep.subr.mxu0 0.0
    %415 = vmatpush1.xpose.msra.mxu0 0.0
    %416 = vmatprep.subr.mxu0 0.0
    %417 = vmatpush1.xpose.msra.mxu0 0.0
    %418 = vmatprep.subr.mxu0 0.0
    %419 = vmatpush1.xpose.msra.mxu0 0.0
    %420 = vmatprep.subr.mxu0 0.0
    %421 = vmatpush1.xpose.msra.mxu0 0.0
    %422 = vmatprep.subr.mxu0 0.0
    %423 = vmatpush1.xpose.msra.mxu0 0.0
    %424 = vmatprep.subr.mxu0 0.0
    %425 = vmatpush1.xpose.msra.mxu0 0.0
    %426 = vmatprep.subr.mxu0 0.0
    %427 = vmatpush1.xpose.msra.mxu0 0.0
    %428 = vmatprep.subr.mxu0 0.0
    %429 = vmatpush1.xpose.msra.mxu0 0.0
    %430 = vmatprep.subr.mxu0 0.0
    %431 = vmatpush1.xpose.msra.mxu0 0.0
    %432 = vmatprep.subr.mxu0 0.0
    %433 = vmatpush1.xpose.msra.mxu0 0.0
    %434 = vmatprep.subr.mxu0 0.0
    %435 = vmatpush1.xpose.msra.mxu0 0.0
    %436 = vmatprep.subr.mxu0 0.0
    %437 = vmatpush1.xpose.msra.mxu0 0.0
    %438 = vmatprep.subr.mxu0 0.0
    %439 = vmatpush1.xpose.msra.mxu0 0.0
    %440 = vmatprep.subr.mxu0 0.0
    %441 = vmatpush1.xpose.msra.mxu0 0.0
    %442 = vmatprep.subr.mxu0 0.0
    %443 = vmatpush1.xpose.msra.mxu0 0.0
    %444 = vmatprep.subr.mxu0 0.0
    %445 = vmatpush1.xpose.msra.mxu0 0.0
    %446 = vmatprep.subr.mxu0 0.0
    %447 = vmatpush1.xpose.msra.mxu0 0.0
    %448 = vmatprep.subr.mxu0 0.0
    %449 = vmatpush1.xpose.msra.mxu0 0.0
    %450 = vmatprep.subr.mxu0 0.0
    %451 = vmatpush1.xpose.msra.mxu0 0.0
    %452 = vmatprep.subr.mxu0 0.0
    %453 = vmatpush1.xpose.msra.mxu0 0.0
    %454 = vmatprep.subr.mxu0 0.0
    %455 = vmatpush1.xpose.msra.mxu0 0.0
    %456 = vmatprep.subr.mxu0 0.0
    %457 = vmatpush1.xpose.msra.mxu0 0.0
    %458 = vmatprep.subr.mxu0 0.0
    %459 = vmatpush1.xpose.msra.mxu0 0.0
    %460 = vmatprep.subr.mxu0 0.0
    %461 = vmatpush1.xpose.msra.mxu0 0.0
    %462 = vmatprep.subr.mxu0 0.0
    %463 = vmatpush1.xpose.msra.mxu0 0.0
    %464 = vmatprep.mubr.f32.mxu0 %v141
    %465 = vmatmul.mubr.f32.gmra.mrb[0].mxu0 %v137
    %v466 = vpop.f32.mrb[0].mxu0
    %v467 = vadd.f32 %v397, %v466
    %v468 = vpop.f32.mrb[0].mxu0
    %469 = vdwg.mxu0
    %470 = vmatprep.subr.mxu0 %v52
    %471 = vmatpush1.xpose.msra.mxu0 %v51
    %472 = vmatprep.subr.mxu0 %v68
    %473 = vmatpush1.xpose.msra.mxu0 %v67
    %474 = vmatprep.subr.mxu0 %v84
    %475 = vmatpush1.xpose.msra.mxu0 %v83
    %476 = vmatprep.subr.mxu0 %v100
    %477 = vmatpush1.xpose.msra.mxu0 %v99
    %478 = vmatprep.subr.mxu0 0.0
    %479 = vmatpush1.xpose.msra.mxu0 0.0
    %480 = vmatprep.subr.mxu0 0.0
    %481 = vmatpush1.xpose.msra.mxu0 0.0
    %482 = vmatprep.subr.mxu0 0.0
    %483 = vmatpush1.xpose.msra.mxu0 0.0
    %484 = vmatprep.subr.mxu0 0.0
    %485 = vmatpush1.xpose.msra.mxu0 0.0
    %486 = vmatprep.subr.mxu0 0.0
    %487 = vmatpush1.xpose.msra.mxu0 0.0
    %488 = vmatprep.subr.mxu0 0.0
    %489 = vmatpush1.xpose.msra.mxu0 0.0
    %490 = vmatprep.subr.mxu0 0.0
    %491 = vmatpush1.xpose.msra.mxu0 0.0
    %492 = vmatprep.subr.mxu0 0.0
    %493 = vmatpush1.xpose.msra.mxu0 0.0
    %494 = vmatprep.subr.mxu0 0.0
    %495 = vmatpush1.xpose.msra.mxu0 0.0
    %496 = vmatprep.subr.mxu0 0.0
    %497 = vmatpush1.xpose.msra.mxu0 0.0
    %498 = vmatprep.subr.mxu0 0.0
    %499 = vmatpush1.xpose.msra.mxu0 0.0
    %500 = vmatprep.subr.mxu0 0.0
    %501 = vmatpush1.xpose.msra.mxu0 0.0
    %502 = vmatprep.subr.mxu0 0.0
    %503 = vmatpush1.xpose.msra.mxu0 0.0
    %504 = vmatprep.subr.mxu0 0.0
    %505 = vmatpush1.xpose.msra.mxu0 0.0
    %506 = vmatprep.subr.mxu0 0.0
    %507 = vmatpush1.xpose.msra.mxu0 0.0
    %508 = vmatprep.subr.mxu0 0.0
    %509 = vmatpush1.xpose.msra.mxu0 0.0
    %510 = vmatprep.subr.mxu0 0.0
    %511 = vmatpush1.xpose.msra.mxu0 0.0
    %512 = vmatprep.subr.mxu0 0.0
    %513 = vmatpush1.xpose.msra.mxu0 0.0
    %514 = vmatprep.subr.mxu0 0.0
    %515 = vmatpush1.xpose.msra.mxu0 0.0
    %516 = vmatprep.subr.mxu0 0.0
    %517 = vmatpush1.xpose.msra.mxu0 0.0
    %518 = vmatprep.subr.mxu0 0.0
    %519 = vmatpush1.xpose.msra.mxu0 0.0
    %520 = vmatprep.subr.mxu0 0.0
    %521 = vmatpush1.xpose.msra.mxu0 0.0
    %522 = vmatprep.subr.mxu0 0.0
    %523 = vmatpush1.xpose.msra.mxu0 0.0
    %524 = vmatprep.subr.mxu0 0.0
    %525 = vmatpush1.xpose.msra.mxu0 0.0
    %526 = vmatprep.subr.mxu0 0.0
    %527 = vmatpush1.xpose.msra.mxu0 0.0
    %528 = vmatprep.subr.mxu0 0.0
    %529 = vmatpush1.xpose.msra.mxu0 0.0
    %530 = vmatprep.subr.mxu0 0.0
    %531 = vmatpush1.xpose.msra.mxu0 0.0
    %532 = vmatprep.subr.mxu0 0.0
    %533 = vmatpush1.xpose.msra.mxu0 0.0
    %534 = vmatprep.mubr.f32.mxu0 %v149
    %535 = vmatmul.mubr.f32.gmra.mrb[0].mxu0 %v145
    %v536 = vpop.f32.mrb[0].mxu0
    %v537 = vadd.f32 %v467, %v536
    %v538 = vpop.f32.mrb[0].mxu0
    %539 = vdwg.mxu0
    %540 = vmatprep.subr.mxu0 %v54
    %541 = vmatpush1.xpose.msra.mxu0 %v53
    %542 = vmatprep.subr.mxu0 %v70
    %543 = vmatpush1.xpose.msra.mxu0 %v69
    %544 = vmatprep.subr.mxu0 %v86
    %545 = vmatpush1.xpose.msra.mxu0 %v85
    %546 = vmatprep.subr.mxu0 %v102
    %547 = vmatpush1.xpose.msra.mxu0 %v101
    %548 = vmatprep.subr.mxu0 0.0
    %549 = vmatpush1.xpose.msra.mxu0 0.0
    %550 = vmatprep.subr.mxu0 0.0
    %551 = vmatpush1.xpose.msra.mxu0 0.0
    %552 = vmatprep.subr.mxu0 0.0
    %553 = vmatpush1.xpose.msra.mxu0 0.0
    %554 = vmatprep.subr.mxu0 0.0
    %555 = vmatpush1.xpose.msra.mxu0 0.0
    %556 = vmatprep.subr.mxu0 0.0
    %557 = vmatpush1.xpose.msra.mxu0 0.0
    %558 = vmatprep.subr.mxu0 0.0
    %559 = vmatpush1.xpose.msra.mxu0 0.0
    %560 = vmatprep.subr.mxu0 0.0
    %561 = vmatpush1.xpose.msra.mxu0 0.0
    %562 = vmatprep.subr.mxu0 0.0
    %563 = vmatpush1.xpose.msra.mxu0 0.0
    %564 = vmatprep.subr.mxu0 0.0
    %565 = vmatpush1.xpose.msra.mxu0 0.0
    %566 = vmatprep.subr.mxu0 0.0
    %567 = vmatpush1.xpose.msra.mxu0 0.0
    %568 = vmatprep.subr.mxu0 0.0
    %569 = vmatpush1.xpose.msra.mxu0 0.0
    %570 = vmatprep.subr.mxu0 0.0
    %571 = vmatpush1.xpose.msra.mxu0 0.0
    %572 = vmatprep.subr.mxu0 0.0
    %573 = vmatpush1.xpose.msra.mxu0 0.0
    %574 = vmatprep.subr.mxu0 0.0
    %575 = vmatpush1.xpose.msra.mxu0 0.0
    %576 = vmatprep.subr.mxu0 0.0
    %577 = vmatpush1.xpose.msra.mxu0 0.0
    %578 = vmatprep.subr.mxu0 0.0
    %579 = vmatpush1.xpose.msra.mxu0 0.0
    %580 = vmatprep.subr.mxu0 0.0
    %581 = vmatpush1.xpose.msra.mxu0 0.0
    %582 = vmatprep.subr.mxu0 0.0
    %583 = vmatpush1.xpose.msra.mxu0 0.0
    %584 = vmatprep.subr.mxu0 0.0
    %585 = vmatpush1.xpose.msra.mxu0 0.0
    %586 = vmatprep.subr.mxu0 0.0
    %587 = vmatpush1.xpose.msra.mxu0 0.0
    %588 = vmatprep.subr.mxu0 0.0
    %589 = vmatpush1.xpose.msra.mxu0 0.0
    %590 = vmatprep.subr.mxu0 0.0
    %591 = vmatpush1.xpose.msra.mxu0 0.0
    %592 = vmatprep.subr.mxu0 0.0
    %593 = vmatpush1.xpose.msra.mxu0 0.0
    %594 = vmatprep.subr.mxu0 0.0
    %595 = vmatpush1.xpose.msra.mxu0 0.0
    %596 = vmatprep.subr.mxu0 0.0
    %597 = vmatpush1.xpose.msra.mxu0 0.0
    %598 = vmatprep.subr.mxu0 0.0
    %599 = vmatpush1.xpose.msra.mxu0 0.0
    %600 = vmatprep.subr.mxu0 0.0
    %601 = vmatpush1.xpose.msra.mxu0 0.0
    %602 = vmatprep.subr.mxu0 0.0
    %603 = vmatpush1.xpose.msra.mxu0 0.0
    %604 = vmatprep.mubr.f32.mxu0 %v157
    %605 = vmatmul.mubr.f32.gmra.mrb[0].mxu0 %v153
    %v606 = vpop.f32.mrb[0].mxu0
    %v607 = vadd.f32 %v537, %v606
    %v608 = vpop.f32.mrb[0].mxu0
    %609 = vdwg.mxu0
    %610 = vmatprep.subr.mxu0 %v56
    %611 = vmatpush1.xpose.msra.mxu0 %v55
    %612 = vmatprep.subr.mxu0 %v72
    %613 = vmatpush1.xpose.msra.mxu0 %v71
    %614 = vmatprep.subr.mxu0 %v88
    %615 = vmatpush1.xpose.msra.mxu0 %v87
    %616 = vmatprep.subr.mxu0 %v104
    %617 = vmatpush1.xpose.msra.mxu0 %v103
    %618 = vmatprep.subr.mxu0 0.0
    %619 = vmatpush1.xpose.msra.mxu0 0.0
    %620 = vmatprep.subr.mxu0 0.0
    %621 = vmatpush1.xpose.msra.mxu0 0.0
    %622 = vmatprep.subr.mxu0 0.0
    %623 = vmatpush1.xpose.msra.mxu0 0.0
    %624 = vmatprep.subr.mxu0 0.0
    %625 = vmatpush1.xpose.msra.mxu0 0.0
    %626 = vmatprep.subr.mxu0 0.0
    %627 = vmatpush1.xpose.msra.mxu0 0.0
    %628 = vmatprep.subr.mxu0 0.0
    %629 = vmatpush1.xpose.msra.mxu0 0.0
    %630 = vmatprep.subr.mxu0 0.0
    %631 = vmatpush1.xpose.msra.mxu0 0.0
    %632 = vmatprep.subr.mxu0 0.0
    %633 = vmatpush1.xpose.msra.mxu0 0.0
    %634 = vmatprep.subr.mxu0 0.0
    %635 = vmatpush1.xpose.msra.mxu0 0.0
    %636 = vmatprep.subr.mxu0 0.0
    %637 = vmatpush1.xpose.msra.mxu0 0.0
    %638 = vmatprep.subr.mxu0 0.0
    %639 = vmatpush1.xpose.msra.mxu0 0.0
    %640 = vmatprep.subr.mxu0 0.0
    %641 = vmatpush1.xpose.msra.mxu0 0.0
    %642 = vmatprep.subr.mxu0 0.0
    %643 = vmatpush1.xpose.msra.mxu0 0.0
    %644 = vmatprep.subr.mxu0 0.0
    %645 = vmatpush1.xpose.msra.mxu0 0.0
    %646 = vmatprep.subr.mxu0 0.0
    %647 = vmatpush1.xpose.msra.mxu0 0.0
    %648 = vmatprep.subr.mxu0 0.0
    %649 = vmatpush1.xpose.msra.mxu0 0.0
    %650 = vmatprep.subr.mxu0 0.0
    %651 = vmatpush1.xpose.msra.mxu0 0.0
    %652 = vmatprep.subr.mxu0 0.0
    %653 = vmatpush1.xpose.msra.mxu0 0.0
    %654 = vmatprep.subr.mxu0 0.0
    %655 = vmatpush1.xpose.msra.mxu0 0.0
    %656 = vmatprep.subr.mxu0 0.0
    %657 = vmatpush1.xpose.msra.mxu0 0.0
    %658 = vmatprep.subr.mxu0 0.0
    %659 = vmatpush1.xpose.msra.mxu0 0.0
    %660 = vmatprep.subr.mxu0 0.0
    %661 = vmatpush1.xpose.msra.mxu0 0.0
    %662 = vmatprep.subr.mxu0 0.0
    %663 = vmatpush1.xpose.msra.mxu0 0.0
    %664 = vmatprep.subr.mxu0 0.0
    %665 = vmatpush1.xpose.msra.mxu0 0.0
    %666 = vmatprep.subr.mxu0 0.0
    %667 = vmatpush1.xpose.msra.mxu0 0.0
    %668 = vmatprep.subr.mxu0 0.0
    %669 = vmatpush1.xpose.msra.mxu0 0.0
    %670 = vmatprep.subr.mxu0 0.0
    %671 = vmatpush1.xpose.msra.mxu0 0.0
    %672 = vmatprep.subr.mxu0 0.0
    %673 = vmatpush1.xpose.msra.mxu0 0.0
    %674 = vmatprep.mubr.f32.mxu0 %v165
    %675 = vmatmul.mubr.f32.gmra.mrb[0].mxu0 %v161
    %v676 = vpop.f32.mrb[0].mxu0
    %v677 = vadd.f32 %v607, %v676
    %v678 = vpop.f32.mrb[0].mxu0
    %679 = vdwg.mxu0
    %680 = vmatprep.subr.mxu0 %v58
    %681 = vmatpush1.xpose.msra.mxu0 %v57
    %682 = vmatprep.subr.mxu0 %v74
    %683 = vmatpush1.xpose.msra.mxu0 %v73
    %684 = vmatprep.subr.mxu0 %v90
    %685 = vmatpush1.xpose.msra.mxu0 %v89
    %686 = vmatprep.subr.mxu0 %v106
    %687 = vmatpush1.xpose.msra.mxu0 %v105
    %688 = vmatprep.subr.mxu0 0.0
    %689 = vmatpush1.xpose.msra.mxu0 0.0
    %690 = vmatprep.subr.mxu0 0.0
    %691 = vmatpush1.xpose.msra.mxu0 0.0
    %692 = vmatprep.subr.mxu0 0.0
    %693 = vmatpush1.xpose.msra.mxu0 0.0
    %694 = vmatprep.subr.mxu0 0.0
    %695 = vmatpush1.xpose.msra.mxu0 0.0
    %696 = vmatprep.subr.mxu0 0.0
    %697 = vmatpush1.xpose.msra.mxu0 0.0
    %698 = vmatprep.subr.mxu0 0.0
    %699 = vmatpush1.xpose.msra.mxu0 0.0
    %700 = vmatprep.subr.mxu0 0.0
    %701 = vmatpush1.xpose.msra.mxu0 0.0
    %702 = vmatprep.subr.mxu0 0.0
    %703 = vmatpush1.xpose.msra.mxu0 0.0
    %704 = vmatprep.subr.mxu0 0.0
    %705 = vmatpush1.xpose.msra.mxu0 0.0
    %706 = vmatprep.subr.mxu0 0.0
    %707 = vmatpush1.xpose.msra.mxu0 0.0
    %708 = vmatprep.subr.mxu0 0.0
    %709 = vmatpush1.xpose.msra.mxu0 0.0
    %710 = vmatprep.subr.mxu0 0.0
    %711 = vmatpush1.xpose.msra.mxu0 0.0
    %712 = vmatprep.subr.mxu0 0.0
    %713 = vmatpush1.xpose.msra.mxu0 0.0
    %714 = vmatprep.subr.mxu0 0.0
    %715 = vmatpush1.xpose.msra.mxu0 0.0
    %716 = vmatprep.subr.mxu0 0.0
    %717 = vmatpush1.xpose.msra.mxu0 0.0
    %718 = vmatprep.subr.mxu0 0.0
    %719 = vmatpush1.xpose.msra.mxu0 0.0
    %720 = vmatprep.subr.mxu0 0.0
    %721 = vmatpush1.xpose.msra.mxu0 0.0
    %722 = vmatprep.subr.mxu0 0.0
    %723 = vmatpush1.xpose.msra.mxu0 0.0
    %724 = vmatprep.subr.mxu0 0.0
    %725 = vmatpush1.xpose.msra.mxu0 0.0
    %726 = vmatprep.subr.mxu0 0.0
    %727 = vmatpush1.xpose.msra.mxu0 0.0
    %728 = vmatprep.subr.mxu0 0.0
    %729 = vmatpush1.xpose.msra.mxu0 0.0
    %730 = vmatprep.subr.mxu0 0.0
    %731 = vmatpush1.xpose.msra.mxu0 0.0
    %732 = vmatprep.subr.mxu0 0.0
    %733 = vmatpush1.xpose.msra.mxu0 0.0
    %734 = vmatprep.subr.mxu0 0.0
    %735 = vmatpush1.xpose.msra.mxu0 0.0
    %736 = vmatprep.subr.mxu0 0.0
    %737 = vmatpush1.xpose.msra.mxu0 0.0
    %738 = vmatprep.subr.mxu0 0.0
    %739 = vmatpush1.xpose.msra.mxu0 0.0
    %740 = vmatprep.subr.mxu0 0.0
    %741 = vmatpush1.xpose.msra.mxu0 0.0
    %742 = vmatprep.subr.mxu0 0.0
    %743 = vmatpush1.xpose.msra.mxu0 0.0
    %744 = vmatprep.mubr.f32.mxu0 %v173
    %745 = vmatmul.mubr.f32.gmra.mrb[0].mxu0 %v169
    %v746 = vpop.f32.mrb[0].mxu0
    %v747 = vadd.f32 %v677, %v746
    %v748 = vpop.f32.mrb[0].mxu0
    %749 = vdwg.mxu0
    %vm750 = vcmask 253952
    %751 = vst.msk [vmem:[#allocation7] sm:$0x1] %vm750, %v747
    // Predicated region
    $region22: #{tpu_custom_call.1} parent=1 // pred_check
      _
    $region23: #{tpu_custom_call.1} parent=1 // pred_check_branch
      %753 = sbr.rel (0) target = $region25
    $region24: #{tpu_custom_call.1} parent=1 // pred_region
      %s755 = ssub.s32 16, 16
      %756 = vsyncadd [#allocation4], %s755
      %s758 = sshll.u32 [#allocation7], 4
      %s759 = int_to_ptr.vmem [resolvable:$true] %s758
      %761 = dma.vmem_to_hbm [thread:$0]  %s759, 16, %s3, [#allocation4]
    $region25: #{tpu_custom_call.1} parent=1 // pred_fallthru
      _
    // Predicated region
    $region26: #{tpu_custom_call.1} parent=1 // pred_check
      _
    $region27: #{tpu_custom_call.1} parent=1 // pred_check_branch
      %763 = sbr.rel (0) target = $region29
    $region28: #{tpu_custom_call.1} parent=1 // pred_region
      %764 = dma.done [#allocation4], 16
    $region29: #{tpu_custom_call.1} parent=1 // pred_fallthru
      _
    %765 = vsyncpa [#allocation3], 1
    %766 = vsyncpa [#allocation6], 1
    %767 = vsyncpa [#allocation4], 1

</llo_original>
